<compile_context>
chip_gen: v7x
topology: tpu7x:2x2x1
jax: 0.10.0
libtpu: 0.0.40
codegen_flags: <defaults>
</compile_context>

<pallas_src>
import functools

import jax
import jax.numpy as jnp
from jax.experimental import pallas as pl
from jax.experimental.pallas import tpu as pltpu

LANE = 128


def _round_up(x, m):
    return (x + m - 1) // m * m


def mlp_kernel(x_ref, w_ref, b_ref, o_ref):
    # x_ref: (TM, D) bf16, w_ref: (3, D, D) bf16, b_ref: (8, D) f32, o_ref: (TM, D) f32
    x = x_ref[...]
    # fc1 + bias + ReLU (dropout = identity at inference)
    h = jnp.dot(x, w_ref[0], preferred_element_type=jnp.float32)
    h = jnp.maximum(h + b_ref[0:1, :], 0.0)
    # fc2 + bias + ReLU
    h = jnp.dot(h.astype(w_ref.dtype), w_ref[1], preferred_element_type=jnp.float32)
    h = jnp.maximum(h + b_ref[1:2, :], 0.0)
    # fc3 + bias (no activation); lane-dense store into the padded output slab.
    o = jnp.dot(h.astype(w_ref.dtype), w_ref[2], preferred_element_type=jnp.float32)
    o_ref[...] = (o + b_ref[2:3, :]).astype(o_ref.dtype)


def neural_net_forward(x, params):
    """Fused MLP forward: x (B, input_size) -> (B, output_size), f32."""
    w1, b1, w2, b2, w3, b3 = params
    in_size = w1.shape[0]
    out_size = w3.shape[1]
    B = x.shape[0]

    # Common padded lane width shared by every feature axis.
    D = _round_up(max(in_size, w1.shape[1], w2.shape[1], out_size, LANE), LANE)

    def pad2(a, rows, cols):
        return jnp.pad(a, ((0, rows - a.shape[0]), (0, cols - a.shape[1])))

    # Single stacked bf16 weight tensor and single f32 bias tensor (fewer DMAs,
    # weights/biases resident in VMEM across the grid).
    w_stack = jnp.stack(
        [pad2(w1, D, D), pad2(w2, D, D), pad2(w3, D, D)]
    ).astype(jnp.bfloat16)                                           # (3, D, D)
    b_stack = jnp.concatenate(
        [pad2(b1, 1, D), pad2(b2, 1, D), pad2(b3, 1, D),
         jnp.zeros((5, D), jnp.float32)], axis=0
    ).astype(jnp.float32)                                            # (8, D)

    # Batch tiling: TM rows per grid step (multiple of 8, capped at 512 so the
    # x/out double buffers stay small while each step still amortizes the
    # ~0.35us per-step overhead).
    TM = min(512, _round_up(B, 8))
    B_pad = _round_up(B, TM)
    x_p = jnp.pad(x, ((0, B_pad - B), (0, D - in_size))).astype(jnp.bfloat16)

    grid = (B_pad // TM,)

    cost = pl.CostEstimate(
        flops=2 * B_pad * D * D * 3,
        transcendentals=0,
        bytes_accessed=(x_p.size * 2 + w_stack.size * 2
                        + b_stack.size * 4 + B_pad * D * 4),
    )

    out_padded = pl.pallas_call(
        mlp_kernel,
        out_shape=jax.ShapeDtypeStruct((B_pad, D), jnp.float32),
        grid=grid,
        in_specs=[
            pl.BlockSpec((TM, D), lambda i: (i, 0)),        # x: pipelined over batch
            pl.BlockSpec((3, D, D), lambda i: (0, 0, 0)),   # weights: resident
            pl.BlockSpec((8, D), lambda i: (0, 0)),         # biases: resident
        ],
        out_specs=pl.BlockSpec((TM, D), lambda i: (i, 0)),  # lane-dense output slab
        compiler_params=pltpu.CompilerParams(
            dimension_semantics=("parallel",),              # megacore split on v7x
            vmem_limit_bytes=64 << 20,
        ),
        cost_estimate=cost,
    )(x_p, w_stack, b_stack)

    return out_padded[:B, :out_size]


def init_params(key, input_size, hidden_size1, hidden_size2, output_size):
    """Deterministic parameter init mirroring nn.Linear shapes.

    PyTorch nn.Linear stores weight (out, in); we store (in, out) so the kernel
    computes x @ W + b directly.
    """
    ks = jax.random.split(key, 6)

    def linear(kw, kb, fan_in, fan_out):
        bound = 1.0 / jnp.sqrt(fan_in)
        w = jax.random.uniform(kw, (fan_in, fan_out), jnp.float32, -bound, bound)
        b = jax.random.uniform(kb, (1, fan_out), jnp.float32, -bound, bound)
        return w, b

    w1, b1 = linear(ks[0], ks[1], input_size, hidden_size1)
    w2, b2 = linear(ks[2], ks[3], hidden_size1, hidden_size2)
    w3, b3 = linear(ks[4], ks[5], hidden_size2, output_size)
    return (w1, b1, w2, b2, w3, b3)


if __name__ == "__main__":
    input_size, hidden_size1, hidden_size2, output_size = 32, 64, 64, 16
    batch = 8

    key = jax.random.PRNGKey(0)
    kx, kp = jax.random.split(key)
    x = jax.random.normal(kx, (batch, input_size), jnp.float32)
    params = init_params(kp, input_size, hidden_size1, hidden_size2, output_size)

    fwd = jax.jit(functools.partial(neural_net_forward))
    out = fwd(x, params)
    jax.block_until_ready(out)

    # Reference check in plain JAX (f32; dropout is identity at inference).
    w1, b1, w2, b2, w3, b3 = params
    ref = jnp.maximum(x @ w1 + b1, 0.0)
    ref = jnp.maximum(ref @ w2 + b2, 0.0)
    ref = ref @ w3 + b3
    assert out.shape == (batch, output_size)
    # Loose tolerance: kernel matmuls run in bf16 (f32 accumulation).
    assert jnp.allclose(out, ref, atol=3e-2, rtol=3e-2), "mismatch vs reference"

    print("KERNEL_OK")
</pallas_src>

<mosaic_0001>
module attributes {stable_mosaic.version = 11 : i64} {
  func.func @mlp_kernel(%arg0: i32, %arg1: memref<8x128xbf16, #tpu.memory_space<vmem>>, %arg2: memref<3x128x128xbf16, #tpu.memory_space<vmem>>, %arg3: memref<8x128xf32, #tpu.memory_space<vmem>>, %arg4: memref<8x128xf32, #tpu.memory_space<vmem>>) attributes {dimension_semantics = [#tpu.dimension_semantics<parallel>], iteration_bounds = array<i64: 1>, scalar_prefetch = 0 : i64, scratch_operands = 0 : i64, tpu.core_type = #tpu.core_type<tc>, window_params = [{transform_indices = @transform_0, window_bounds = array<i64: 8, 128>}, {pipeline_mode = #tpu.pipeline_mode<synchronous>, transform_indices = @transform_1, window_bounds = array<i64: 3, 128, 128>}, {pipeline_mode = #tpu.pipeline_mode<synchronous>, transform_indices = @transform_2, window_bounds = array<i64: 8, 128>}, {transform_indices = @transform_3, window_bounds = array<i64: 8, 128>}]} {
    %c0 = arith.constant 0 : index
    %c0_0 = arith.constant 0 : index
    %0 = vector.load %arg1[%c0, %c0_0] : memref<8x128xbf16, #tpu.memory_space<vmem>>, vector<8x128xbf16>
    %c0_1 = arith.constant 0 : index
    %c0_2 = arith.constant 0 : index
    %c0_3 = arith.constant 0 : index
    %1 = vector.load %arg2[%c0_1, %c0_2, %c0_3] : memref<3x128x128xbf16, #tpu.memory_space<vmem>>, vector<1x128x128xbf16>
    %2 = vector.shape_cast %1 : vector<1x128x128xbf16> to vector<128x128xbf16>
    %cst = arith.constant dense<0.000000e+00> : vector<8x128xf32>
    %3 = tpu.matmul %0, %2, %cst {dimension_numbers = #tpu.dot_dimension_numbers<[1], [0], [0], [1], [0, 0, 1, 1], [], []>} : vector<8x128xbf16>, vector<128x128xbf16>, vector<8x128xf32> -> vector<8x128xf32>
    %c0_4 = arith.constant 0 : index
    %c0_5 = arith.constant 0 : index
    %4 = vector.load %arg3[%c0_4, %c0_5] : memref<8x128xf32, #tpu.memory_space<vmem>>, vector<1x128xf32>
    %5 = vector.broadcast %4 : vector<1x128xf32> to vector<8x128xf32>
    %6 = arith.addf %3, %5 : vector<8x128xf32>
    %cst_6 = arith.constant 0.000000e+00 : f32
    %7 = vector.broadcast %cst_6 : f32 to vector<8x128xf32>
    %8 = arith.maximumf %6, %7 : vector<8x128xf32>
    %9 = arith.truncf %8 : vector<8x128xf32> to vector<8x128xbf16>
    %c1 = arith.constant 1 : index
    %c0_7 = arith.constant 0 : index
    %c0_8 = arith.constant 0 : index
    %10 = vector.load %arg2[%c1, %c0_7, %c0_8] : memref<3x128x128xbf16, #tpu.memory_space<vmem>>, vector<1x128x128xbf16>
    %11 = vector.shape_cast %10 : vector<1x128x128xbf16> to vector<128x128xbf16>
    %cst_9 = arith.constant dense<0.000000e+00> : vector<8x128xf32>
    %12 = tpu.matmul %9, %11, %cst_9 {dimension_numbers = #tpu.dot_dimension_numbers<[1], [0], [0], [1], [0, 0, 1, 1], [], []>} : vector<8x128xbf16>, vector<128x128xbf16>, vector<8x128xf32> -> vector<8x128xf32>
    %c1_10 = arith.constant 1 : index
    %c0_11 = arith.constant 0 : index
    %13 = vector.load %arg3[%c1_10, %c0_11] : memref<8x128xf32, #tpu.memory_space<vmem>>, vector<1x128xf32>
    %14 = vector.broadcast %13 : vector<1x128xf32> to vector<8x128xf32>
    %15 = arith.addf %12, %14 : vector<8x128xf32>
    %cst_12 = arith.constant 0.000000e+00 : f32
    %16 = vector.broadcast %cst_12 : f32 to vector<8x128xf32>
    %17 = arith.maximumf %15, %16 : vector<8x128xf32>
    %18 = arith.truncf %17 : vector<8x128xf32> to vector<8x128xbf16>
    %c2 = arith.constant 2 : index
    %c0_13 = arith.constant 0 : index
    %c0_14 = arith.constant 0 : index
    %19 = vector.load %arg2[%c2, %c0_13, %c0_14] : memref<3x128x128xbf16, #tpu.memory_space<vmem>>, vector<1x128x128xbf16>
    %20 = vector.shape_cast %19 : vector<1x128x128xbf16> to vector<128x128xbf16>
    %cst_15 = arith.constant dense<0.000000e+00> : vector<8x128xf32>
    %21 = tpu.matmul %18, %20, %cst_15 {dimension_numbers = #tpu.dot_dimension_numbers<[1], [0], [0], [1], [0, 0, 1, 1], [], []>} : vector<8x128xbf16>, vector<128x128xbf16>, vector<8x128xf32> -> vector<8x128xf32>
    %c2_16 = arith.constant 2 : index
    %c0_17 = arith.constant 0 : index
    %22 = vector.load %arg3[%c2_16, %c0_17] : memref<8x128xf32, #tpu.memory_space<vmem>>, vector<1x128xf32>
    %23 = vector.broadcast %22 : vector<1x128xf32> to vector<8x128xf32>
    %24 = arith.addf %21, %23 : vector<8x128xf32>
    %c0_18 = arith.constant 0 : index
    %c0_19 = arith.constant 0 : index
    %25 = vector.load %arg4[%c0_18, %c0_19] : memref<8x128xf32, #tpu.memory_space<vmem>>, vector<8x128xf32>
    tpu.vector_store %arg4[%c0_18, %c0_19], %24 {strides = array<i32>} : memref<8x128xf32, #tpu.memory_space<vmem>>, vector<8x128xf32>,
    return
  }
  func.func @transform_0(%arg0: i32) -> (i32, i32) {
    %c0_i32 = arith.constant 0 : i32
    %c0_i32_0 = arith.constant 0 : i32
    return %arg0, %c0_i32 : i32, i32
  }
  func.func @transform_1(%arg0: i32) -> (i32, i32, i32) {
    %c0_i32 = arith.constant 0 : i32
    %c0_i32_0 = arith.constant 0 : i32
    %c0_i32_1 = arith.constant 0 : i32
    %c0_i32_2 = arith.constant 0 : i32
    return %c0_i32, %c0_i32_0, %c0_i32_1 : i32, i32, i32
  }
  func.func @transform_2(%arg0: i32) -> (i32, i32) {
    %c0_i32 = arith.constant 0 : i32
    %c0_i32_0 = arith.constant 0 : i32
    %c0_i32_1 = arith.constant 0 : i32
    return %c0_i32, %c0_i32_0 : i32, i32
  }
  func.func @transform_3(%arg0: i32) -> (i32, i32) {
    %c0_i32 = arith.constant 0 : i32
    %c0_i32_0 = arith.constant 0 : i32
    return %arg0, %c0_i32 : i32, i32
  }
}

</mosaic_0001>

<llo_original>
// kernel: neural_net_forward.1
$region0: #{neural_net_forward.1}
  #allocation0 [shape = 'u32[]', space=smem, size = 0x4, offset = 0x4, fixed_abs, tag = 'smem constant byte address 0x4 - core index']
  #allocation1 [shape = 'u32[144,128]{1,0:T(1,128)}', space=vmem, size = 0x12000, scoped, tag = 'internal scratch']
  %s0 = inlined_call_operand.hbm [shape: bf16[8,128], index: 0, kind: input, shape index: {}]
  %s1 = inlined_call_operand.hbm [shape: bf16[3,128,128], index: 1, kind: input, shape index: {}]
  %s2 = inlined_call_operand.hbm [shape: f32[8,128], index: 2, kind: input, shape index: {}]
  %s3 = inlined_call_operand.hbm [shape: f32[8,128], index: 3, kind: output, shape index: {}]
  %s4 = sld [smem:[#allocation0]]
  $region34: #{neural_net_forward.1} parent=0
    _
  %s6 = ssub.s32 1, %s4
  %s7 = scalar_select 0, %s6, %s4
  $region1: #{neural_net_forward.1} parent=0
    #allocation2 [shape = 'u8[2048]{0}', space=vmem, size = 0x800, scoped, tag = 'input window, operand 0, single buffered']
    #allocation3 [shape = 's32[1]{0}', space=sflag, size = 0x4, scoped, tag = 'scoped memory for neural_net_forward.1']
    #allocation4 [shape = 's32[1]{0}', space=sflag, size = 0x4, scoped, tag = 'scoped memory for neural_net_forward.1']
    #allocation5 [shape = 'u8[98304]{0}', space=vmem, size = 0x18000, scoped, tag = 'input window, operand 1, single buffered']
    #allocation6 [shape = 's32[1]{0}', space=sflag, size = 0x4, scoped, tag = 'scoped memory for neural_net_forward.1']
    #allocation7 [shape = 'u8[4096]{0}', space=vmem, size = 0x1000, scoped, tag = 'input window, operand 2, single buffered']
    #allocation8 [shape = 'u8[4096]{0}', space=vmem, size = 0x1000, scoped, tag = 'output window, operand 0, single buffered']
    %8 = vsyncpa [#allocation3], 0
    %9 = vsyncpa [#allocation6], 0
    %10 = vsyncpa [#allocation4], 0
    // Predicated region
    $region2: #{neural_net_forward.1} parent=1 // pred_check
      _
    $region3: #{neural_net_forward.1} parent=1 // pred_check_branch
      %12 = sbr.rel (0) target = $region5
    $region4: #{neural_net_forward.1} parent=1 // pred_region
      %s14 = ssub.s32 64, 64
      %15 = vsyncadd [#allocation3], %s14
      %s17 = sshll.u32 [#allocation2], 4
      %s18 = int_to_ptr.vmem [resolvable:$true] %s17
      %20 = dma.hbm_to_vmem [thread:$0]  %s0, 64, %s18, [#allocation3]
    $region5: #{neural_net_forward.1} parent=1 // pred_fallthru
      _
    // Predicated region
    $region6: #{neural_net_forward.1} parent=1 // pred_check
      _
    $region7: #{neural_net_forward.1} parent=1 // pred_check_branch
      %22 = sbr.rel (0) target = $region9
    $region8: #{neural_net_forward.1} parent=1 // pred_region
      %s24 = ssub.s32 3072, 3072
      %25 = vsyncadd [#allocation6], %s24
      %s26 = sshll.u32 [#allocation5], 4
      %s27 = int_to_ptr.vmem [resolvable:$true] %s26
      %32 = dma.hbm_to_vmem [thread:$0]  %s1, 3072, %s27, [#allocation6], 64, 64, 4
    $region9: #{neural_net_forward.1} parent=1 // pred_fallthru
      _
    // Predicated region
    $region10: #{neural_net_forward.1} parent=1 // pred_check
      _
    $region11: #{neural_net_forward.1} parent=1 // pred_check_branch
      %34 = sbr.rel (0) target = $region13
    $region12: #{neural_net_forward.1} parent=1 // pred_region
      %s36 = ssub.s32 128, 128
      %37 = vsyncadd [#allocation6], %s36
      %s39 = sshll.u32 [#allocation7], 4
      %s40 = int_to_ptr.vmem [resolvable:$true] %s39
      %42 = dma.hbm_to_vmem [thread:$0]  %s2, 128, %s40, [#allocation6]
    $region13: #{neural_net_forward.1} parent=1 // pred_fallthru
      _
    // Predicated region
    $region14: #{neural_net_forward.1} parent=1 // pred_check
      _
    $region15: #{neural_net_forward.1} parent=1 // pred_check_branch
      %44 = sbr.rel (0) target = $region17
    $region16: #{neural_net_forward.1} parent=1 // pred_region
      %45 = dma.done [#allocation3], 64
    $region17: #{neural_net_forward.1} parent=1 // pred_fallthru
      _
    // Predicated region
    $region18: #{neural_net_forward.1} parent=1 // pred_check
      _
    $region19: #{neural_net_forward.1} parent=1 // pred_check_branch
      %47 = sbr.rel (0) target = $region21
    $region20: #{neural_net_forward.1} parent=1 // pred_region
      %48 = dma.done [#allocation6], 3072
    $region21: #{neural_net_forward.1} parent=1 // pred_fallthru
      _
    // Predicated region
    $region22: #{neural_net_forward.1} parent=1 // pred_check
      _
    $region23: #{neural_net_forward.1} parent=1 // pred_check_branch
      %50 = sbr.rel (0) target = $region25
    $region24: #{neural_net_forward.1} parent=1 // pred_region
      %51 = dma.done [#allocation6], 128
    $region25: #{neural_net_forward.1} parent=1 // pred_fallthru
      _
    %v53 = vld [vmem:[#allocation2] sm:$0xf]
    %v54 = vld [vmem:[#allocation5] sm:$0xf]
    %v55 = vld [vmem:[#allocation5 + $0x4] sm:$0xf]
    %v56 = vld [vmem:[#allocation5 + $0x8] sm:$0xf]
    %v57 = vld [vmem:[#allocation5 + $0xc] sm:$0xf]
    %v58 = vld [vmem:[#allocation5 + $0x10] sm:$0xf]
    %v59 = vld [vmem:[#allocation5 + $0x14] sm:$0xf]
    %v60 = vld [vmem:[#allocation5 + $0x18] sm:$0xf]
    %v61 = vld [vmem:[#allocation5 + $0x1c] sm:$0xf]
    %v62 = vld [vmem:[#allocation5 + $0x20] sm:$0xf]
    %v63 = vld [vmem:[#allocation5 + $0x24] sm:$0xf]
    %v64 = vld [vmem:[#allocation5 + $0x28] sm:$0xf]
    %v65 = vld [vmem:[#allocation5 + $0x2c] sm:$0xf]
    %v66 = vld [vmem:[#allocation5 + $0x30] sm:$0xf]
    %v67 = vld [vmem:[#allocation5 + $0x34] sm:$0xf]
    %v68 = vld [vmem:[#allocation5 + $0x38] sm:$0xf]
    %v69 = vld [vmem:[#allocation5 + $0x3c] sm:$0xf]
    %v70 = vld [vmem:[#allocation7] sm:$0x1]
    %v71 = vlaneseq
    %v72 = vshrl.u32 %v71, 7
    %v73 = vsub.s32 0, %v72
    %v74 = vrot.slane %v70, %v73
    %v91 = vunpack.c.l.b16 %v54
    %v92 = vunpack.c.l.b16 %v55
    %v93 = vunpack.c.l.b16 %v56
    %v94 = vunpack.c.l.b16 %v57
    %v95 = vunpack.c.l.b16 %v58
    %v96 = vunpack.c.l.b16 %v59
    %v97 = vunpack.c.l.b16 %v60
    %v98 = vunpack.c.l.b16 %v61
    %v99 = vunpack.c.l.b16 %v62
    %v100 = vunpack.c.l.b16 %v63
    %v101 = vunpack.c.l.b16 %v64
    %v102 = vunpack.c.l.b16 %v65
    %v103 = vunpack.c.l.b16 %v66
    %v104 = vunpack.c.l.b16 %v67
    %v105 = vunpack.c.l.b16 %v68
    %v106 = vunpack.c.l.b16 %v69
    %v107 = vpack.c.b16 %v92, %v91
    %v108 = vpack.c.b16 %v94, %v93
    %v109 = vpack.c.b16 %v96, %v95
    %v110 = vpack.c.b16 %v98, %v97
    %v111 = vpack.c.b16 %v100, %v99
    %v112 = vpack.c.b16 %v102, %v101
    %v113 = vpack.c.b16 %v104, %v103
    %v114 = vpack.c.b16 %v106, %v105
    %123 = vmatprep.subr.bf16.mxu0 0
    %124 = vmatpush1.bf16.msra.mxu0 %v107
    %125 = vmatprep.subr.bf16.mxu0 0
    %126 = vmatpush1.bf16.msra.mxu0 %v108
    %127 = vmatprep.subr.bf16.mxu0 0
    %128 = vmatpush1.bf16.msra.mxu0 %v109
    %129 = vmatprep.subr.bf16.mxu0 0
    %130 = vmatpush1.bf16.msra.mxu0 %v110
    %131 = vmatprep.subr.bf16.mxu0 0
    %132 = vmatpush1.bf16.msra.mxu0 %v111
    %133 = vmatprep.subr.bf16.mxu0 0
    %134 = vmatpush1.bf16.msra.mxu0 %v112
    %135 = vmatprep.subr.bf16.mxu0 0
    %136 = vmatpush1.bf16.msra.mxu0 %v113
    %137 = vmatprep.subr.bf16.mxu0 0
    %138 = vmatpush1.bf16.msra.mxu0 %v114
    %139 = vmatprep.subr.bf16.mxu0 0
    %140 = vmatpush1.bf16.msra.mxu0 0
    %141 = vmatprep.subr.bf16.mxu0 0
    %142 = vmatpush1.bf16.msra.mxu0 0
    %143 = vmatprep.subr.bf16.mxu0 0
    %144 = vmatpush1.bf16.msra.mxu0 0
    %145 = vmatprep.subr.bf16.mxu0 0
    %146 = vmatpush1.bf16.msra.mxu0 0
    %147 = vmatprep.subr.bf16.mxu0 0
    %148 = vmatpush1.bf16.msra.mxu0 0
    %149 = vmatprep.subr.bf16.mxu0 0
    %150 = vmatpush1.bf16.msra.mxu0 0
    %151 = vmatprep.subr.bf16.mxu0 0
    %152 = vmatpush1.bf16.msra.mxu0 0
    %153 = vmatprep.subr.bf16.mxu0 0
    %154 = vmatpush1.bf16.msra.mxu0 0
    %155 = vmatprep.mubr.bf16.mxu0 0
    %156 = vmatmul.mubr.bf16.gmra.mrb[0].mxu0 %v53
    %v157 = vpop.f32.mrb[0].mxu0
    %v158 = vadd.f32 %v74, %v157
    %v159 = vpop.f32.mrb[0].mxu0
    %v160 = vpop.f32.mrb[0].mxu0
    %v161 = vpop.f32.mrb[0].mxu0
    %162 = vdwg.mxu0
    %v163 = vmax.f32 %v158, 0.0
    %v164 = vpack.c.bf16 %v163, %v163
    %s165 = scalar_lea.vmem [#allocation5], 64
    %v166 = vld [vmem:[%s165] sm:$0xf]
    %v167 = vld [vmem:[%s165 + $0x4] sm:$0xf]
    %v168 = vld [vmem:[%s165 + $0x8] sm:$0xf]
    %v169 = vld [vmem:[%s165 + $0xc] sm:$0xf]
    %v170 = vld [vmem:[%s165 + $0x10] sm:$0xf]
    %v171 = vld [vmem:[%s165 + $0x14] sm:$0xf]
    %v172 = vld [vmem:[%s165 + $0x18] sm:$0xf]
    %v173 = vld [vmem:[%s165 + $0x1c] sm:$0xf]
    %v174 = vld [vmem:[%s165 + $0x20] sm:$0xf]
    %v175 = vld [vmem:[%s165 + $0x24] sm:$0xf]
    %v176 = vld [vmem:[%s165 + $0x28] sm:$0xf]
    %v177 = vld [vmem:[%s165 + $0x2c] sm:$0xf]
    %v178 = vld [vmem:[%s165 + $0x30] sm:$0xf]
    %v179 = vld [vmem:[%s165 + $0x34] sm:$0xf]
    %v180 = vld [vmem:[%s165 + $0x38] sm:$0xf]
    %v181 = vld [vmem:[%s165 + $0x3c] sm:$0xf]
    %v182 = vld [vmem:[#allocation7 + $0x1] sm:$0x1]
    %v183 = vlaneseq
    %v184 = vshrl.u32 %v183, 7
    %v185 = vsub.s32 0, %v184
    %v186 = vrot.slane %v182, %v185
    %v203 = vunpack.c.l.b16 %v166
    %v204 = vunpack.c.l.b16 %v167
    %v205 = vunpack.c.l.b16 %v168
    %v206 = vunpack.c.l.b16 %v169
    %v207 = vunpack.c.l.b16 %v170
    %v208 = vunpack.c.l.b16 %v171
    %v209 = vunpack.c.l.b16 %v172
    %v210 = vunpack.c.l.b16 %v173
    %v211 = vunpack.c.l.b16 %v174
    %v212 = vunpack.c.l.b16 %v175
    %v213 = vunpack.c.l.b16 %v176
    %v214 = vunpack.c.l.b16 %v177
    %v215 = vunpack.c.l.b16 %v178
    %v216 = vunpack.c.l.b16 %v179
    %v217 = vunpack.c.l.b16 %v180
    %v218 = vunpack.c.l.b16 %v181
    %v219 = vpack.c.b16 %v204, %v203
    %v220 = vpack.c.b16 %v206, %v205
    %v221 = vpack.c.b16 %v208, %v207
    %v222 = vpack.c.b16 %v210, %v209
    %v223 = vpack.c.b16 %v212, %v211
    %v224 = vpack.c.b16 %v214, %v213
    %v225 = vpack.c.b16 %v216, %v215
    %v226 = vpack.c.b16 %v218, %v217
    %235 = vmatprep.subr.bf16.mxu0 0
    %236 = vmatpush1.bf16.msra.mxu0 %v219
    %237 = vmatprep.subr.bf16.mxu0 0
    %238 = vmatpush1.bf16.msra.mxu0 %v220
    %239 = vmatprep.subr.bf16.mxu0 0
    %240 = vmatpush1.bf16.msra.mxu0 %v221
    %241 = vmatprep.subr.bf16.mxu0 0
    %242 = vmatpush1.bf16.msra.mxu0 %v222
    %243 = vmatprep.subr.bf16.mxu0 0
    %244 = vmatpush1.bf16.msra.mxu0 %v223
    %245 = vmatprep.subr.bf16.mxu0 0
    %246 = vmatpush1.bf16.msra.mxu0 %v224
    %247 = vmatprep.subr.bf16.mxu0 0
    %248 = vmatpush1.bf16.msra.mxu0 %v225
    %249 = vmatprep.subr.bf16.mxu0 0
    %250 = vmatpush1.bf16.msra.mxu0 %v226
    %251 = vmatprep.subr.bf16.mxu0 0
    %252 = vmatpush1.bf16.msra.mxu0 0
    %253 = vmatprep.subr.bf16.mxu0 0
    %254 = vmatpush1.bf16.msra.mxu0 0
    %255 = vmatprep.subr.bf16.mxu0 0
    %256 = vmatpush1.bf16.msra.mxu0 0
    %257 = vmatprep.subr.bf16.mxu0 0
    %258 = vmatpush1.bf16.msra.mxu0 0
    %259 = vmatprep.subr.bf16.mxu0 0
    %260 = vmatpush1.bf16.msra.mxu0 0
    %261 = vmatprep.subr.bf16.mxu0 0
    %262 = vmatpush1.bf16.msra.mxu0 0
    %263 = vmatprep.subr.bf16.mxu0 0
    %264 = vmatpush1.bf16.msra.mxu0 0
    %265 = vmatprep.subr.bf16.mxu0 0
    %266 = vmatpush1.bf16.msra.mxu0 0
    %267 = vmatprep.mubr.bf16.mxu0 0
    %268 = vmatmul.mubr.bf16.gmra.mrb[0].mxu0 %v164
    %v269 = vpop.f32.mrb[0].mxu0
    %v270 = vadd.f32 %v186, %v269
    %v271 = vpop.f32.mrb[0].mxu0
    %v272 = vpop.f32.mrb[0].mxu0
    %v273 = vpop.f32.mrb[0].mxu0
    %274 = vdwg.mxu0
    %v275 = vmax.f32 %v270, 0.0
    %v276 = vpack.c.bf16 %v275, %v275
    %s277 = scalar_lea.vmem [#allocation5], 128
    %v278 = vld [vmem:[%s277] sm:$0xf]
    %v279 = vld [vmem:[%s277 + $0x4] sm:$0xf]
    %v280 = vld [vmem:[%s277 + $0x8] sm:$0xf]
    %v281 = vld [vmem:[%s277 + $0xc] sm:$0xf]
    %v282 = vld [vmem:[%s277 + $0x10] sm:$0xf]
    %v283 = vld [vmem:[%s277 + $0x14] sm:$0xf]
    %v284 = vld [vmem:[%s277 + $0x18] sm:$0xf]
    %v285 = vld [vmem:[%s277 + $0x1c] sm:$0xf]
    %v286 = vld [vmem:[%s277 + $0x20] sm:$0xf]
    %v287 = vld [vmem:[%s277 + $0x24] sm:$0xf]
    %v288 = vld [vmem:[%s277 + $0x28] sm:$0xf]
    %v289 = vld [vmem:[%s277 + $0x2c] sm:$0xf]
    %v290 = vld [vmem:[%s277 + $0x30] sm:$0xf]
    %v291 = vld [vmem:[%s277 + $0x34] sm:$0xf]
    %v292 = vld [vmem:[%s277 + $0x38] sm:$0xf]
    %v293 = vld [vmem:[%s277 + $0x3c] sm:$0xf]
    %v294 = vld [vmem:[#allocation7 + $0x2] sm:$0x1]
    %v295 = vlaneseq
    %v296 = vshrl.u32 %v295, 7
    %v297 = vsub.s32 0, %v296
    %v298 = vrot.slane %v294, %v297
    %v315 = vunpack.c.l.b16 %v278
    %v316 = vunpack.c.l.b16 %v279
    %v317 = vunpack.c.l.b16 %v280
    %v318 = vunpack.c.l.b16 %v281
    %v319 = vunpack.c.l.b16 %v282
    %v320 = vunpack.c.l.b16 %v283
    %v321 = vunpack.c.l.b16 %v284
    %v322 = vunpack.c.l.b16 %v285
    %v323 = vunpack.c.l.b16 %v286
    %v324 = vunpack.c.l.b16 %v287
    %v325 = vunpack.c.l.b16 %v288
    %v326 = vunpack.c.l.b16 %v289
    %v327 = vunpack.c.l.b16 %v290
    %v328 = vunpack.c.l.b16 %v291
    %v329 = vunpack.c.l.b16 %v292
    %v330 = vunpack.c.l.b16 %v293
    %v331 = vpack.c.b16 %v316, %v315
    %v332 = vpack.c.b16 %v318, %v317
    %v333 = vpack.c.b16 %v320, %v319
    %v334 = vpack.c.b16 %v322, %v321
    %v335 = vpack.c.b16 %v324, %v323
    %v336 = vpack.c.b16 %v326, %v325
    %v337 = vpack.c.b16 %v328, %v327
    %v338 = vpack.c.b16 %v330, %v329
    %347 = vmatprep.subr.bf16.mxu0 0
    %348 = vmatpush1.bf16.msra.mxu0 %v331
    %349 = vmatprep.subr.bf16.mxu0 0
    %350 = vmatpush1.bf16.msra.mxu0 %v332
    %351 = vmatprep.subr.bf16.mxu0 0
    %352 = vmatpush1.bf16.msra.mxu0 %v333
    %353 = vmatprep.subr.bf16.mxu0 0
    %354 = vmatpush1.bf16.msra.mxu0 %v334
    %355 = vmatprep.subr.bf16.mxu0 0
    %356 = vmatpush1.bf16.msra.mxu0 %v335
    %357 = vmatprep.subr.bf16.mxu0 0
    %358 = vmatpush1.bf16.msra.mxu0 %v336
    %359 = vmatprep.subr.bf16.mxu0 0
    %360 = vmatpush1.bf16.msra.mxu0 %v337
    %361 = vmatprep.subr.bf16.mxu0 0
    %362 = vmatpush1.bf16.msra.mxu0 %v338
    %363 = vmatprep.subr.bf16.mxu0 0
    %364 = vmatpush1.bf16.msra.mxu0 0
    %365 = vmatprep.subr.bf16.mxu0 0
    %366 = vmatpush1.bf16.msra.mxu0 0
    %367 = vmatprep.subr.bf16.mxu0 0
    %368 = vmatpush1.bf16.msra.mxu0 0
    %369 = vmatprep.subr.bf16.mxu0 0
    %370 = vmatpush1.bf16.msra.mxu0 0
    %371 = vmatprep.subr.bf16.mxu0 0
    %372 = vmatpush1.bf16.msra.mxu0 0
    %373 = vmatprep.subr.bf16.mxu0 0
    %374 = vmatpush1.bf16.msra.mxu0 0
    %375 = vmatprep.subr.bf16.mxu0 0
    %376 = vmatpush1.bf16.msra.mxu0 0
    %377 = vmatprep.subr.bf16.mxu0 0
    %378 = vmatpush1.bf16.msra.mxu0 0
    %379 = vmatprep.mubr.bf16.mxu0 0
    %380 = vmatmul.mubr.bf16.gmra.mrb[0].mxu0 %v276
    %v381 = vpop.f32.mrb[0].mxu0
    %v382 = vadd.f32 %v298, %v381
    %v383 = vpop.f32.mrb[0].mxu0
    %v384 = vpop.f32.mrb[0].mxu0
    %v385 = vpop.f32.mrb[0].mxu0
    %386 = vdwg.mxu0
    %387 = vst [vmem:[#allocation8] sm:$0xff] %v382
    // Predicated region
    $region26: #{neural_net_forward.1} parent=1 // pred_check
      _
    $region27: #{neural_net_forward.1} parent=1 // pred_check_branch
      %389 = sbr.rel (0) target = $region29
    $region28: #{neural_net_forward.1} parent=1 // pred_region
      %s391 = ssub.s32 128, 128
      %392 = vsyncadd [#allocation4], %s391
      %s394 = sshll.u32 [#allocation8], 4
      %s395 = int_to_ptr.vmem [resolvable:$true] %s394
      %397 = dma.vmem_to_hbm [thread:$0]  %s395, 128, %s3, [#allocation4]
    $region29: #{neural_net_forward.1} parent=1 // pred_fallthru
      _
    // Predicated region
    $region30: #{neural_net_forward.1} parent=1 // pred_check
      _
    $region31: #{neural_net_forward.1} parent=1 // pred_check_branch
      %399 = sbr.rel (0) target = $region33
    $region32: #{neural_net_forward.1} parent=1 // pred_region
      %400 = dma.done [#allocation4], 128
    $region33: #{neural_net_forward.1} parent=1 // pred_fallthru
      _
    %401 = vsyncpa [#allocation3], 1
    %402 = vsyncpa [#allocation6], 1
    %403 = vsyncpa [#allocation4], 1

</llo_original>
